<compile_context>
chip_gen: v7x
topology: tpu7x:2x2x1
jax: 0.10.0
libtpu: 0.0.40
codegen_flags: <defaults>
</compile_context>

<pallas_src>
import functools

import jax
import jax.numpy as jnp
from jax.experimental import pallas as pl
from jax.experimental.pallas import tpu as pltpu

_SUBLANE = 8
_LANE = 128


def cnn_kernel(x_ref, w_ref, b_ref, o_ref, *, n_batch, l_pad):
    # x_ref: (N * L_pad, CK)  im2col'd input, all batch elements stacked
    # w_ref: (CK, C_pad)      conv weight flattened over (C_in, k), lane-padded
    # b_ref: (1, C_pad)       conv bias, lane-padded
    # o_ref: (N, C_pad)       pooled output (lane-padded)
    s = jnp.dot(x_ref[...], w_ref[...],
                preferred_element_type=jnp.float32)        # (N*L_pad, C_pad)
    b = b_ref[...]                                         # (1, C_pad)
    # Per-batch max over the time axis (AdaptiveMaxPool1d(1)); slices are
    # sublane-aligned because L_pad % 8 == 0. Bias + ReLU applied post-max.
    for n in range(n_batch):                               # static unroll (N small)
        m = jnp.max(s[n * l_pad:(n + 1) * l_pad, :], axis=0, keepdims=True)
        o_ref[pl.ds(n, 1), :] = jnp.maximum(m + b, 0.0).astype(o_ref.dtype)


def im2col_1d(x, k):
    # x: (N, C_in, L) -> (N, L_out, C_in * k); the (C_in, k) flattening order
    # matches PyTorch's Conv1d weight layout (C_out, C_in, k).
    N, C, L = x.shape
    L_out = L - k + 1
    cols = jnp.stack([x[:, :, j:j + L_out] for j in range(k)], axis=-1)  # (N,C,L_out,k)
    cols = jnp.transpose(cols, (0, 2, 1, 3)).reshape(N, L_out, C * k)
    return cols


def _round_up(v, m):
    return ((v + m - 1) // m) * m


def cnn_forward(x, weight, bias):
    """x: (N, C_in, L) f32; weight: (C_out, C_in, k); bias: (C_out,)."""
    N, C_in, L = x.shape
    C_out, _, k = weight.shape
    L_out = L - k + 1
    CK = C_in * k

    x_unf = im2col_1d(x, k)                                # (N, L_out, CK)

    # Pad the time axis up to a sublane multiple by repeating the last window;
    # duplicated rows cannot change the max over time.
    L_pad = _round_up(L_out, _SUBLANE)
    if L_pad != L_out:
        tail = jnp.broadcast_to(x_unf[:, -1:, :], (N, L_pad - L_out, CK))
        x_unf = jnp.concatenate([x_unf, tail], axis=1)
    x_flat = x_unf.reshape(N * L_pad, CK)                  # (N*L_pad, CK)

    # Pad C_out up to the 128-lane width so matmul/store are lane-dense; the
    # zero columns (zero weight + zero bias) are sliced off afterwards.
    C_pad = _round_up(max(C_out, _LANE), _LANE)
    w_mat = jnp.zeros((CK, C_pad), jnp.float32)
    w_mat = w_mat.at[:, :C_out].set(weight.reshape(C_out, CK).T)
    b_mat = jnp.zeros((1, C_pad), jnp.float32)
    b_mat = b_mat.at[:, :C_out].set(bias.reshape(1, C_out))

    kernel = functools.partial(cnn_kernel, n_batch=N, l_pad=L_pad)

    out_pad = pl.pallas_call(
        kernel,
        out_shape=jax.ShapeDtypeStruct((N, C_pad), jnp.float32),
        grid_spec=pltpu.PrefetchScalarGridSpec(
            num_scalar_prefetch=0,
            grid=(1,),                                     # single grid step
            in_specs=[
                pl.BlockSpec((N * L_pad, CK), lambda i: (0, 0)),
                pl.BlockSpec((CK, C_pad), lambda i: (0, 0)),
                pl.BlockSpec((1, C_pad), lambda i: (0, 0)),
            ],
            out_specs=pl.BlockSpec((N, C_pad), lambda i: (0, 0)),
        ),
        compiler_params=pltpu.CompilerParams(
            dimension_semantics=("parallel",)),
    )(x_flat, w_mat, b_mat)

    return out_pad[:, :C_out]


def cnn_reference(x, weight, bias):
    # Pure-JAX reference (Conv1d -> ReLU -> max over time).
    y = jax.lax.conv_general_dilated(
        x, weight, window_strides=(1,), padding="VALID",
        dimension_numbers=("NCH", "OIH", "NCH"))
    y = y + bias[None, :, None]
    y = jnp.maximum(y, 0.0)
    return jnp.max(y, axis=2)


if __name__ == "__main__":
    key = jax.random.PRNGKey(0)
    k_x, k_w, k_b = jax.random.split(key, 3)

    # Small shapes implied by the module: batch=2, in_channels=4, length=16,
    # out_channels=8, kernel_size=5.
    N, C_in, L = 2, 4, 16
    C_out, ksz = 8, 5

    x = jax.random.normal(k_x, (N, C_in, L), dtype=jnp.float32)
    fan_in = C_in * ksz
    bound = 1.0 / (fan_in ** 0.5)
    weight = jax.random.uniform(k_w, (C_out, C_in, ksz), jnp.float32,
                                minval=-bound, maxval=bound)
    bias = jax.random.uniform(k_b, (C_out,), jnp.float32,
                              minval=-bound, maxval=bound)

    out = cnn_forward(x, weight, bias)
    out = jax.block_until_ready(out)

    ref = cnn_reference(x, weight, bias)
    assert out.shape == (N, C_out)
    assert jnp.allclose(out, ref, atol=1e-5, rtol=1e-5), (out, ref)

    print("KERNEL_OK")
</pallas_src>

<mosaic_0001>
module attributes {stable_mosaic.version = 11 : i64} {
  func.func @cnn_kernel(%arg0: i32, %arg1: memref<32x20xf32, #tpu.memory_space<vmem>>, %arg2: memref<20x128xf32, #tpu.memory_space<vmem>>, %arg3: memref<1x128xf32, #tpu.memory_space<vmem>>, %arg4: memref<2x128xf32, #tpu.memory_space<vmem>>) attributes {dimension_semantics = [#tpu.dimension_semantics<parallel>], iteration_bounds = array<i64: 1>, scalar_prefetch = 0 : i64, scratch_operands = 0 : i64, tpu.core_type = #tpu.core_type<tc>, window_params = [{pipeline_mode = #tpu.pipeline_mode<synchronous>, transform_indices = @transform_0, window_bounds = array<i64: 32, 20>}, {pipeline_mode = #tpu.pipeline_mode<synchronous>, transform_indices = @transform_1, window_bounds = array<i64: 20, 128>}, {pipeline_mode = #tpu.pipeline_mode<synchronous>, transform_indices = @transform_2, window_bounds = array<i64: 1, 128>}, {pipeline_mode = #tpu.pipeline_mode<synchronous>, transform_indices = @transform_3, window_bounds = array<i64: 2, 128>}]} {
    %c0 = arith.constant 0 : index
    %c0_0 = arith.constant 0 : index
    %0 = vector.load %arg1[%c0, %c0_0] : memref<32x20xf32, #tpu.memory_space<vmem>>, vector<32x20xf32>
    %c0_1 = arith.constant 0 : index
    %c0_2 = arith.constant 0 : index
    %1 = vector.load %arg2[%c0_1, %c0_2] : memref<20x128xf32, #tpu.memory_space<vmem>>, vector<20x128xf32>
    %cst = arith.constant dense<0.000000e+00> : vector<32x128xf32>
    %2 = tpu.matmul %0, %1, %cst {dimension_numbers = #tpu.dot_dimension_numbers<[1], [0], [0], [1], [0, 0, 1, 1], [], []>} : vector<32x20xf32>, vector<20x128xf32>, vector<32x128xf32> -> vector<32x128xf32>
    %c0_3 = arith.constant 0 : index
    %c0_4 = arith.constant 0 : index
    %3 = vector.load %arg3[%c0_3, %c0_4] : memref<1x128xf32, #tpu.memory_space<vmem>>, vector<1x128xf32>
    %4 = vector.extract_strided_slice %2 {offsets = [0, 0], sizes = [16, 128], strides = [1, 1]} : vector<32x128xf32> to vector<16x128xf32>
    %cst_5 = arith.constant dense<0xFF800000> : vector<128xf32>
    %5 = vector.multi_reduction <maximumf>, %4, %cst_5 [0] : vector<16x128xf32> to vector<128xf32>
    %6 = vector.shape_cast %5 : vector<128xf32> to vector<1x128xf32>
    %7 = arith.addf %6, %3 : vector<1x128xf32>
    %cst_6 = arith.constant 0.000000e+00 : f32
    %8 = vector.broadcast %cst_6 : f32 to vector<1x128xf32>
    %9 = arith.maximumf %7, %8 : vector<1x128xf32>
    %c0_7 = arith.constant 0 : index
    %c0_8 = arith.constant 0 : index
    %10 = vector.load %arg4[%c0_7, %c0_8] : memref<2x128xf32, #tpu.memory_space<vmem>>, vector<1x128xf32>
    tpu.vector_store %arg4[%c0_7, %c0_8], %9 {strides = array<i32>} : memref<2x128xf32, #tpu.memory_space<vmem>>, vector<1x128xf32>,
    %11 = vector.extract_strided_slice %2 {offsets = [16, 0], sizes = [16, 128], strides = [1, 1]} : vector<32x128xf32> to vector<16x128xf32>
    %cst_9 = arith.constant dense<0xFF800000> : vector<128xf32>
    %12 = vector.multi_reduction <maximumf>, %11, %cst_9 [0] : vector<16x128xf32> to vector<128xf32>
    %13 = vector.shape_cast %12 : vector<128xf32> to vector<1x128xf32>
    %14 = arith.addf %13, %3 : vector<1x128xf32>
    %cst_10 = arith.constant 0.000000e+00 : f32
    %15 = vector.broadcast %cst_10 : f32 to vector<1x128xf32>
    %16 = arith.maximumf %14, %15 : vector<1x128xf32>
    %c1 = arith.constant 1 : index
    %c0_11 = arith.constant 0 : index
    %17 = vector.load %arg4[%c1, %c0_11] : memref<2x128xf32, #tpu.memory_space<vmem>>, vector<1x128xf32>
    tpu.vector_store %arg4[%c1, %c0_11], %16 {strides = array<i32>} : memref<2x128xf32, #tpu.memory_space<vmem>>, vector<1x128xf32>,
    return
  }
  func.func @transform_0(%arg0: i32) -> (i32, i32) {
    %c0_i32 = arith.constant 0 : i32
    %c0_i32_0 = arith.constant 0 : i32
    %c0_i32_1 = arith.constant 0 : i32
    return %c0_i32, %c0_i32_0 : i32, i32
  }
  func.func @transform_1(%arg0: i32) -> (i32, i32) {
    %c0_i32 = arith.constant 0 : i32
    %c0_i32_0 = arith.constant 0 : i32
    %c0_i32_1 = arith.constant 0 : i32
    return %c0_i32, %c0_i32_0 : i32, i32
  }
  func.func @transform_2(%arg0: i32) -> (i32, i32) {
    %c0_i32 = arith.constant 0 : i32
    %c0_i32_0 = arith.constant 0 : i32
    %c0_i32_1 = arith.constant 0 : i32
    return %c0_i32, %c0_i32_0 : i32, i32
  }
  func.func @transform_3(%arg0: i32) -> (i32, i32) {
    %c0_i32 = arith.constant 0 : i32
    %c0_i32_0 = arith.constant 0 : i32
    %c0_i32_1 = arith.constant 0 : i32
    return %c0_i32, %c0_i32_0 : i32, i32
  }
}

</mosaic_0001>

<llo_original>
// kernel: tpu_custom_call.1
$region0: #{tpu_custom_call.1}
  #allocation0 [shape = 'u32[]', space=smem, size = 0x4, offset = 0x4, fixed_abs, tag = 'smem constant byte address 0x4 - core index']
  #allocation1 [shape = 'u32[144,128]{1,0:T(1,128)}', space=vmem, size = 0x12000, scoped, tag = 'internal scratch']
  %s0 = inlined_call_operand.vmem [shape: f32[32,20], index: 0, kind: input, shape index: {}]
  %s1 = inlined_call_operand.vmem [shape: f32[20,128], index: 1, kind: input, shape index: {}]
  %s2 = inlined_call_operand.vmem [shape: f32[1,128], index: 2, kind: input, shape index: {}]
  %s3 = inlined_call_operand.hbm [shape: f32[2,128], index: 3, kind: output, shape index: {}]
  %s4 = sld [smem:[#allocation0]]
  $region22: #{tpu_custom_call.1} parent=0
    _
  %s6 = ssub.s32 1, %s4
  %s7 = scalar_select 0, %s6, %s4
  $region1: #{tpu_custom_call.1} parent=0
    #allocation2 [shape = 'u8[1024]{0}', space=vmem, size = 0x400, scoped, tag = 'output window, operand 0, single buffered']
    #allocation3 [shape = 's32[1]{0}', space=sflag, size = 0x4, scoped, tag = 'scoped memory for tpu_custom_call.1']
    %8 = vsyncpa [#allocation3], 0
    // Predicated region
    $region2: #{tpu_custom_call.1} parent=1 // pred_check
      _
    $region3: #{tpu_custom_call.1} parent=1 // pred_check_branch
      %10 = sbr.rel (0) target = $region5
    $region4: #{tpu_custom_call.1} parent=1 // pred_region
      _
    $region5: #{tpu_custom_call.1} parent=1 // pred_fallthru
      _
    // Predicated region
    $region6: #{tpu_custom_call.1} parent=1 // pred_check
      _
    $region7: #{tpu_custom_call.1} parent=1 // pred_check_branch
      %12 = sbr.rel (0) target = $region9
    $region8: #{tpu_custom_call.1} parent=1 // pred_region
      _
    $region9: #{tpu_custom_call.1} parent=1 // pred_fallthru
      _
    // Predicated region
    $region10: #{tpu_custom_call.1} parent=1 // pred_check
      _
    $region11: #{tpu_custom_call.1} parent=1 // pred_check_branch
      %14 = sbr.rel (0) target = $region13
    $region12: #{tpu_custom_call.1} parent=1 // pred_region
      _
    $region13: #{tpu_custom_call.1} parent=1 // pred_fallthru
      _
    %v15 = vld [vmem:[%s0] sm:$0xff]
    %v16 = vld [vmem:[%s0 + $0x8] sm:$0xff]
    %v17 = vld [vmem:[%s0 + $0x10] sm:$0xff]
    %v18 = vld [vmem:[%s0 + $0x18] sm:$0xff]
    %v19 = vld [vmem:[%s1] sm:$0xff]
    %v20 = vld [vmem:[%s1 + $0x8] sm:$0xff]
    %v21 = vld [vmem:[%s1 + $0x10] sm:$0xf]
    %vm22 = vcmask 162816
    %v24 = vsel %vm22, %v15, 0
    %v27 = vsel %vm22, %v16, 0
    %v30 = vsel %vm22, %v17, 0
    %v33 = vsel %vm22, %v18, 0
    %vm35 = vcmask 1043456
    %v37 = vsel %vm35, %v21, 0
    %39 = vmatprep.subr.mxu0 0.0
    %40 = vmatpush1.msra.mxu0 %v19
    %41 = vmatprep.subr.mxu0 0.0
    %42 = vmatpush1.msra.mxu0 %v20
    %43 = vmatprep.subr.mxu0 0.0
    %44 = vmatpush1.msra.mxu0 %v37
    %45 = vmatprep.subr.mxu0 0.0
    %46 = vmatpush1.msra.mxu0 0.0
    %47 = vmatprep.subr.mxu0 0.0
    %48 = vmatpush1.msra.mxu0 0.0
    %49 = vmatprep.subr.mxu0 0.0
    %50 = vmatpush1.msra.mxu0 0.0
    %51 = vmatprep.subr.mxu0 0.0
    %52 = vmatpush1.msra.mxu0 0.0
    %53 = vmatprep.subr.mxu0 0.0
    %54 = vmatpush1.msra.mxu0 0.0
    %55 = vmatprep.subr.mxu0 0.0
    %56 = vmatpush1.msra.mxu0 0.0
    %57 = vmatprep.subr.mxu0 0.0
    %58 = vmatpush1.msra.mxu0 0.0
    %59 = vmatprep.subr.mxu0 0.0
    %60 = vmatpush1.msra.mxu0 0.0
    %61 = vmatprep.subr.mxu0 0.0
    %62 = vmatpush1.msra.mxu0 0.0
    %63 = vmatprep.subr.mxu0 0.0
    %64 = vmatpush1.msra.mxu0 0.0
    %65 = vmatprep.subr.mxu0 0.0
    %66 = vmatpush1.msra.mxu0 0.0
    %67 = vmatprep.subr.mxu0 0.0
    %68 = vmatpush1.msra.mxu0 0.0
    %69 = vmatprep.subr.mxu0 0.0
    %70 = vmatpush1.msra.mxu0 0.0
    %71 = vmatprep.subr.mxu0 0.0
    %72 = vmatpush1.msra.mxu0 0.0
    %73 = vmatprep.subr.mxu0 0.0
    %74 = vmatpush1.msra.mxu0 0.0
    %75 = vmatprep.subr.mxu0 0.0
    %76 = vmatpush1.msra.mxu0 0.0
    %77 = vmatprep.subr.mxu0 0.0
    %78 = vmatpush1.msra.mxu0 0.0
    %79 = vmatprep.subr.mxu0 0.0
    %80 = vmatpush1.msra.mxu0 0.0
    %81 = vmatprep.subr.mxu0 0.0
    %82 = vmatpush1.msra.mxu0 0.0
    %83 = vmatprep.subr.mxu0 0.0
    %84 = vmatpush1.msra.mxu0 0.0
    %85 = vmatprep.subr.mxu0 0.0
    %86 = vmatpush1.msra.mxu0 0.0
    %87 = vmatprep.subr.mxu0 0.0
    %88 = vmatpush1.msra.mxu0 0.0
    %89 = vmatprep.subr.mxu0 0.0
    %90 = vmatpush1.msra.mxu0 0.0
    %91 = vmatprep.subr.mxu0 0.0
    %92 = vmatpush1.msra.mxu0 0.0
    %93 = vmatprep.subr.mxu0 0.0
    %94 = vmatpush1.msra.mxu0 0.0
    %95 = vmatprep.subr.mxu0 0.0
    %96 = vmatpush1.msra.mxu0 0.0
    %97 = vmatprep.subr.mxu0 0.0
    %98 = vmatpush1.msra.mxu0 0.0
    %99 = vmatprep.subr.mxu0 0.0
    %100 = vmatpush1.msra.mxu0 0.0
    %101 = vmatprep.subr.mxu0 0.0
    %102 = vmatpush1.msra.mxu0 0.0
    %103 = vmatprep.mubr.f32.mxu0 0.0
    %104 = vmatmul.mubr.f32.gmra.mrb[0].mxu0 %v24
    %v105 = vpop.f32.mrb[0].mxu0
    %v106 = vadd.f32 0.0, %v105
    %v107 = vpop.f32.mrb[0].mxu0
    %108 = vmatprep.mubr.f32.mxu0 0.0
    %109 = vmatmul.mubr.f32.gmra.mrb[0].mxu0 %v27
    %v110 = vpop.f32.mrb[0].mxu0
    %v111 = vadd.f32 0.0, %v110
    %v112 = vpop.f32.mrb[0].mxu0
    %113 = vmatprep.mubr.f32.mxu0 0.0
    %114 = vmatmul.mubr.f32.gmra.mrb[0].mxu0 %v30
    %v115 = vpop.f32.mrb[0].mxu0
    %v116 = vadd.f32 0.0, %v115
    %v117 = vpop.f32.mrb[0].mxu0
    %118 = vmatprep.mubr.f32.mxu0 0.0
    %119 = vmatmul.mubr.f32.gmra.mrb[0].mxu0 %v33
    %v120 = vpop.f32.mrb[0].mxu0
    %v121 = vadd.f32 0.0, %v120
    %v122 = vpop.f32.mrb[0].mxu0
    %123 = vdwg.mxu0
    %v124 = vld [vmem:[%s2] sm:$0x1]
    %v125 = vmax.f32 %v106, %v111
    %v126 = vrot.slane %v125, 4
    %v127 = vmax.f32 %v125, %v126
    %v128 = vrot.slane %v127, 2
    %v129 = vmax.f32 %v127, %v128
    %v130 = vrot.slane %v129, 1
    %v131 = vmax.f32 %v129, %v130
    %v132 = vadd.f32 %v131, %v124
    %v133 = vmax.f32 %v132, 0.0
    %134 = vst [vmem:[#allocation2] sm:$0x1] %v133
    %v135 = vmax.f32 %v116, %v121
    %v136 = vrot.slane %v135, 4
    %v137 = vmax.f32 %v135, %v136
    %v138 = vrot.slane %v137, 2
    %v139 = vmax.f32 %v137, %v138
    %v140 = vrot.slane %v139, 1
    %v141 = vmax.f32 %v139, %v140
    %v142 = vadd.f32 %v141, %v124
    %v143 = vmax.f32 %v142, 0.0
    %144 = vst [vmem:[#allocation2 + $0x1] sm:$0x1] %v143
    // Predicated region
    $region14: #{tpu_custom_call.1} parent=1 // pred_check
      _
    $region15: #{tpu_custom_call.1} parent=1 // pred_check_branch
      %146 = sbr.rel (0) target = $region17
    $region16: #{tpu_custom_call.1} parent=1 // pred_region
      %s148 = ssub.s32 32, 32
      %149 = vsyncadd [#allocation3], %s148
      %s151 = sshll.u32 [#allocation2], 4
      %s152 = int_to_ptr.vmem [resolvable:$true] %s151
      %154 = dma.vmem_to_hbm [thread:$0]  %s152, 32, %s3, [#allocation3]
    $region17: #{tpu_custom_call.1} parent=1 // pred_fallthru
      _
    // Predicated region
    $region18: #{tpu_custom_call.1} parent=1 // pred_check
      _
    $region19: #{tpu_custom_call.1} parent=1 // pred_check_branch
      %156 = sbr.rel (0) target = $region21
    $region20: #{tpu_custom_call.1} parent=1 // pred_region
      %157 = dma.done [#allocation3], 32
    $region21: #{tpu_custom_call.1} parent=1 // pred_fallthru
      _
    %158 = vsyncpa [#allocation3], 1

</llo_original>
